<compile_context>
chip_gen: v6e
topology: v6e:2x2x1
jax: 0.10.0
libtpu: 0.0.40
codegen_flags: <defaults>
</compile_context>

<pallas_src>
import jax
import jax.numpy as jnp
from jax.experimental import pallas as pl
from jax.experimental.pallas import tpu as pltpu


def _round_up(n, m):
    return ((n + m - 1) // m) * m


def last_layer_kernel(x_ref, w1_ref, b1_ref, w2_ref, b2_ref, w3_ref, b3_ref, o_ref):
    # encoder layer 1: Linear(IN, 128) + ReLU   (bf16 MXU inputs, f32 accumulate)
    x = x_ref[...].astype(jnp.bfloat16)                         # f32 -> bf16 cast on VPU
    h = jnp.dot(x, w1_ref[...], preferred_element_type=jnp.float32)
    h = jnp.maximum(h + b1_ref[...], 0.0)                       # f32 VPU
    # encoder layer 2: Linear(128, 64) + ReLU
    h = jnp.dot(h.astype(jnp.bfloat16), w2_ref[...], preferred_element_type=jnp.float32)
    h = jnp.maximum(h + b2_ref[...], 0.0)
    # supervised head: Linear(64, 10)
    o = jnp.dot(h.astype(jnp.bfloat16), w3_ref[...], preferred_element_type=jnp.float32)
    o_ref[...] = (o + b3_ref[...]).astype(o_ref.dtype)


def prepare_params(w1, b1, w2, b2, w3, b3):
    """Hoisted out of the per-call path: cast weights to bf16 (MXU inputs) once."""
    return (w1.astype(jnp.bfloat16), b1.reshape(1, -1).astype(jnp.float32),
            w2.astype(jnp.bfloat16), b2.reshape(1, -1).astype(jnp.float32),
            w3.astype(jnp.bfloat16), b3.reshape(1, -1).astype(jnp.float32))


def last_layer_forward(x_nchw, params, *, tb_max=1024):
    """x_nchw: (B, C, H, W) float32.  params from prepare_params (weights in
    (in_features, out_features) layout).  Returns logits (B, 10) float32."""
    w1, b1, w2, b2, w3, b3 = params
    B = x_nchw.shape[0]
    x_flat = x_nchw.reshape(B, -1).astype(jnp.float32)   # torch's x.view(x.size(0), -1)
    in_dim = x_flat.shape[1]
    h1 = w1.shape[1]      # 128
    h2 = w2.shape[1]      # 64
    n_out = w3.shape[1]   # 10
    assert w1.shape[0] == in_dim, "encoder input dim mismatch"

    # ---- batch tiling: big tiles (amortize per-step cost), minimal padding, >=2 tiles
    # once the batch is big enough so the "parallel" axis feeds both v7x TensorCores. ----
    n_tiles = max(pl.cdiv(B, tb_max), 2 if B >= 16 else 1)
    tb = _round_up(pl.cdiv(B, n_tiles), 8)

    # conservative VMEM estimate: double-buffered x/out tiles + 2x tiny resident weights
    # + in-kernel intermediates; clamp tb so it fits a budget that works on v5e/v6e/v7x.
    def vmem_est(t):
        wbytes = (in_dim * h1 + h1 * h2 + h2 * n_out) * 2 + (h1 + h2 + n_out) * 4
        interm = t * (2 * in_dim + 6 * h1 + 6 * h2 + 4 * n_out)
        return 2 * t * in_dim * 4 + 2 * t * n_out * 4 + 2 * wbytes + interm

    budget = 32 * 1024 * 1024
    while vmem_est(tb) > budget and tb > 8:
        tb = max(8, _round_up(tb // 2, 8))
        n_tiles = pl.cdiv(B, tb)
    b_pad = n_tiles * tb

    # pad batch rows only when needed (stays f32 — no bf16 re-materialization of x)
    if b_pad != B:
        xin = jnp.zeros((b_pad, in_dim), jnp.float32).at[:B, :].set(x_flat)
    else:
        xin = x_flat

    flops = 2 * b_pad * (in_dim * h1 + h1 * h2 + h2 * n_out)
    bytes_accessed = (
        b_pad * in_dim * 4                                   # x read (f32)
        + (in_dim * h1 + h1 * h2 + h2 * n_out) * 2           # bf16 weights
        + (h1 + h2 + n_out) * 4                              # f32 biases
        + b_pad * n_out * 4)                                 # logits writeback

    out = pl.pallas_call(
        last_layer_kernel,
        out_shape=jax.ShapeDtypeStruct((b_pad, n_out), jnp.float32),
        grid_spec=pltpu.PrefetchScalarGridSpec(
            num_scalar_prefetch=0,
            grid=(n_tiles,),
            in_specs=[
                pl.BlockSpec((tb, in_dim), lambda i: (i, 0)),   # x tile (pipelined, f32)
                pl.BlockSpec((in_dim, h1), lambda i: (0, 0)),   # w1 (VMEM-resident, bf16)
                pl.BlockSpec((1, h1), lambda i: (0, 0)),        # b1
                pl.BlockSpec((h1, h2), lambda i: (0, 0)),       # w2 (64 lanes = full dim)
                pl.BlockSpec((1, h2), lambda i: (0, 0)),        # b2
                pl.BlockSpec((h2, n_out), lambda i: (0, 0)),    # w3 (10 lanes = full dim)
                pl.BlockSpec((1, n_out), lambda i: (0, 0)),     # b3
            ],
            out_specs=pl.BlockSpec((tb, n_out), lambda i: (i, 0)),
        ),
        compiler_params=pltpu.CompilerParams(
            dimension_semantics=("parallel",),   # shard batch tiles across v7x's 2 TCs
            vmem_limit_bytes=int(min(max(vmem_est(tb) + (4 << 20), 16 << 20), 48 << 20)),
        ),
        cost_estimate=pl.CostEstimate(
            flops=flops, transcendentals=0, bytes_accessed=bytes_accessed),
    )(xin, w1, b1, w2, b2, w3, b3)

    return out[:B] if b_pad != B else out


def _init_linear(key, fan_in, fan_out):
    # mimic torch.nn.Linear default init: U(-1/sqrt(fan_in), 1/sqrt(fan_in))
    kw, kb = jax.random.split(key)
    bound = 1.0 / jnp.sqrt(jnp.float32(fan_in))
    w = jax.random.uniform(kw, (fan_in, fan_out), jnp.float32, -bound, bound)
    b = jax.random.uniform(kb, (1, fan_out), jnp.float32, -bound, bound)
    return w, b


if __name__ == "__main__":
    # small deterministic inputs: batch=2, channels=1, spatial=16 -> flat dim 256
    B, C, H, W = 2, 1, 16, 16
    IN = C * H * W  # 256

    key = jax.random.PRNGKey(0)
    kx, k1, k2, k3 = jax.random.split(key, 4)

    x = jax.random.normal(kx, (B, C, H, W), jnp.float32)
    w1, b1 = _init_linear(k1, IN, 128)   # encoder layer 1
    w2, b2 = _init_linear(k2, 128, 64)   # encoder layer 2
    w3, b3 = _init_linear(k3, 64, 10)    # supervised_part Linear(64, 10)

    params = prepare_params(w1, b1, w2, b2, w3, b3)   # bf16 weight cast hoisted (once)
    out = last_layer_forward(x, params)
    out = jax.block_until_ready(out)

    # pure-JAX reference mirroring the kernel's bf16-input / f32-accumulate numerics
    xf = x.reshape(B, -1)
    w1b, w2b, w3b = params[0], params[2], params[4]
    ref = jnp.maximum(
        jnp.dot(xf.astype(jnp.bfloat16), w1b, preferred_element_type=jnp.float32)
        + b1.reshape(1, -1), 0.0)
    ref = jnp.maximum(
        jnp.dot(ref.astype(jnp.bfloat16), w2b, preferred_element_type=jnp.float32)
        + b2.reshape(1, -1), 0.0)
    ref = jnp.dot(ref.astype(jnp.bfloat16), w3b, preferred_element_type=jnp.float32) \
        + b3.reshape(1, -1)

    assert out.shape == (B, 10)
    assert jnp.allclose(out, ref, atol=1e-2, rtol=1e-2), "mismatch vs reference"

    print("KERNEL_OK")
</pallas_src>

<mosaic_0001>
module attributes {stable_mosaic.version = 11 : i64} {
  func.func @last_layer_kernel(%arg0: i32, %arg1: memref<8x256xf32, #tpu.memory_space<vmem>>, %arg2: memref<256x128xbf16, #tpu.memory_space<vmem>>, %arg3: memref<1x128xf32, #tpu.memory_space<vmem>>, %arg4: memref<128x64xbf16, #tpu.memory_space<vmem>>, %arg5: memref<1x64xf32, #tpu.memory_space<vmem>>, %arg6: memref<64x10xbf16, #tpu.memory_space<vmem>>, %arg7: memref<1x10xf32, #tpu.memory_space<vmem>>, %arg8: memref<8x10xf32, #tpu.memory_space<vmem>>) attributes {dimension_semantics = [#tpu.dimension_semantics<parallel>], iteration_bounds = array<i64: 1>, scalar_prefetch = 0 : i64, scratch_operands = 0 : i64, tpu.core_type = #tpu.core_type<tc>, window_params = [{transform_indices = @transform_0, window_bounds = array<i64: 8, 256>}, {pipeline_mode = #tpu.pipeline_mode<synchronous>, transform_indices = @transform_1, window_bounds = array<i64: 256, 128>}, {pipeline_mode = #tpu.pipeline_mode<synchronous>, transform_indices = @transform_2, window_bounds = array<i64: 1, 128>}, {pipeline_mode = #tpu.pipeline_mode<synchronous>, transform_indices = @transform_3, window_bounds = array<i64: 128, 64>}, {pipeline_mode = #tpu.pipeline_mode<synchronous>, transform_indices = @transform_4, window_bounds = array<i64: 1, 64>}, {pipeline_mode = #tpu.pipeline_mode<synchronous>, transform_indices = @transform_5, window_bounds = array<i64: 64, 10>}, {pipeline_mode = #tpu.pipeline_mode<synchronous>, transform_indices = @transform_6, window_bounds = array<i64: 1, 10>}, {transform_indices = @transform_7, window_bounds = array<i64: 8, 10>}]} {
    %c0 = arith.constant 0 : index
    %c0_0 = arith.constant 0 : index
    %0 = vector.load %arg1[%c0, %c0_0] : memref<8x256xf32, #tpu.memory_space<vmem>>, vector<8x256xf32>
    %1 = arith.truncf %0 : vector<8x256xf32> to vector<8x256xbf16>
    %c0_1 = arith.constant 0 : index
    %c0_2 = arith.constant 0 : index
    %2 = vector.load %arg2[%c0_1, %c0_2] : memref<256x128xbf16, #tpu.memory_space<vmem>>, vector<256x128xbf16>
    %cst = arith.constant dense<0.000000e+00> : vector<8x128xf32>
    %3 = tpu.matmul %1, %2, %cst {dimension_numbers = #tpu.dot_dimension_numbers<[1], [0], [0], [1], [0, 0, 1, 1], [], []>} : vector<8x256xbf16>, vector<256x128xbf16>, vector<8x128xf32> -> vector<8x128xf32>
    %c0_3 = arith.constant 0 : index
    %c0_4 = arith.constant 0 : index
    %4 = vector.load %arg3[%c0_3, %c0_4] : memref<1x128xf32, #tpu.memory_space<vmem>>, vector<1x128xf32>
    %5 = vector.broadcast %4 : vector<1x128xf32> to vector<8x128xf32>
    %6 = arith.addf %3, %5 : vector<8x128xf32>
    %cst_5 = arith.constant 0.000000e+00 : f32
    %7 = vector.broadcast %cst_5 : f32 to vector<8x128xf32>
    %8 = arith.maximumf %6, %7 : vector<8x128xf32>
    %9 = arith.truncf %8 : vector<8x128xf32> to vector<8x128xbf16>
    %c0_6 = arith.constant 0 : index
    %c0_7 = arith.constant 0 : index
    %10 = vector.load %arg4[%c0_6, %c0_7] : memref<128x64xbf16, #tpu.memory_space<vmem>>, vector<128x64xbf16>
    %cst_8 = arith.constant dense<0.000000e+00> : vector<8x64xf32>
    %11 = tpu.matmul %9, %10, %cst_8 {dimension_numbers = #tpu.dot_dimension_numbers<[1], [0], [0], [1], [0, 0, 1, 1], [], []>} : vector<8x128xbf16>, vector<128x64xbf16>, vector<8x64xf32> -> vector<8x64xf32>
    %c0_9 = arith.constant 0 : index
    %c0_10 = arith.constant 0 : index
    %12 = vector.load %arg5[%c0_9, %c0_10] : memref<1x64xf32, #tpu.memory_space<vmem>>, vector<1x64xf32>
    %13 = vector.broadcast %12 : vector<1x64xf32> to vector<8x64xf32>
    %14 = arith.addf %11, %13 : vector<8x64xf32>
    %cst_11 = arith.constant 0.000000e+00 : f32
    %15 = vector.broadcast %cst_11 : f32 to vector<8x64xf32>
    %16 = arith.maximumf %14, %15 : vector<8x64xf32>
    %17 = arith.truncf %16 : vector<8x64xf32> to vector<8x64xbf16>
    %c0_12 = arith.constant 0 : index
    %c0_13 = arith.constant 0 : index
    %18 = vector.load %arg6[%c0_12, %c0_13] : memref<64x10xbf16, #tpu.memory_space<vmem>>, vector<64x10xbf16>
    %cst_14 = arith.constant dense<0.000000e+00> : vector<8x10xf32>
    %19 = tpu.matmul %17, %18, %cst_14 {dimension_numbers = #tpu.dot_dimension_numbers<[1], [0], [0], [1], [0, 0, 1, 1], [], []>} : vector<8x64xbf16>, vector<64x10xbf16>, vector<8x10xf32> -> vector<8x10xf32>
    %c0_15 = arith.constant 0 : index
    %c0_16 = arith.constant 0 : index
    %20 = vector.load %arg7[%c0_15, %c0_16] : memref<1x10xf32, #tpu.memory_space<vmem>>, vector<1x10xf32>
    %21 = vector.broadcast %20 : vector<1x10xf32> to vector<8x10xf32>
    %22 = arith.addf %19, %21 : vector<8x10xf32>
    %c0_17 = arith.constant 0 : index
    %c0_18 = arith.constant 0 : index
    %23 = vector.load %arg8[%c0_17, %c0_18] : memref<8x10xf32, #tpu.memory_space<vmem>>, vector<8x10xf32>
    tpu.vector_store %arg8[%c0_17, %c0_18], %22 {strides = array<i32>} : memref<8x10xf32, #tpu.memory_space<vmem>>, vector<8x10xf32>,
    return
  }
  func.func @transform_0(%arg0: i32) -> (i32, i32) {
    %c0_i32 = arith.constant 0 : i32
    %c0_i32_0 = arith.constant 0 : i32
    return %arg0, %c0_i32 : i32, i32
  }
  func.func @transform_1(%arg0: i32) -> (i32, i32) {
    %c0_i32 = arith.constant 0 : i32
    %c0_i32_0 = arith.constant 0 : i32
    %c0_i32_1 = arith.constant 0 : i32
    return %c0_i32, %c0_i32_0 : i32, i32
  }
  func.func @transform_2(%arg0: i32) -> (i32, i32) {
    %c0_i32 = arith.constant 0 : i32
    %c0_i32_0 = arith.constant 0 : i32
    %c0_i32_1 = arith.constant 0 : i32
    return %c0_i32, %c0_i32_0 : i32, i32
  }
  func.func @transform_3(%arg0: i32) -> (i32, i32) {
    %c0_i32 = arith.constant 0 : i32
    %c0_i32_0 = arith.constant 0 : i32
    %c0_i32_1 = arith.constant 0 : i32
    return %c0_i32, %c0_i32_0 : i32, i32
  }
  func.func @transform_4(%arg0: i32) -> (i32, i32) {
    %c0_i32 = arith.constant 0 : i32
    %c0_i32_0 = arith.constant 0 : i32
    %c0_i32_1 = arith.constant 0 : i32
    return %c0_i32, %c0_i32_0 : i32, i32
  }
  func.func @transform_5(%arg0: i32) -> (i32, i32) {
    %c0_i32 = arith.constant 0 : i32
    %c0_i32_0 = arith.constant 0 : i32
    %c0_i32_1 = arith.constant 0 : i32
    return %c0_i32, %c0_i32_0 : i32, i32
  }
  func.func @transform_6(%arg0: i32) -> (i32, i32) {
    %c0_i32 = arith.constant 0 : i32
    %c0_i32_0 = arith.constant 0 : i32
    %c0_i32_1 = arith.constant 0 : i32
    return %c0_i32, %c0_i32_0 : i32, i32
  }
  func.func @transform_7(%arg0: i32) -> (i32, i32) {
    %c0_i32 = arith.constant 0 : i32
    %c0_i32_0 = arith.constant 0 : i32
    return %arg0, %c0_i32 : i32, i32
  }
}

</mosaic_0001>

<llo_original>
// kernel: tpu_custom_call.1
$region0: #{tpu_custom_call.1}
  #allocation0 [shape = 'u32[]', space=smem, size = 0x4, offset = 0x4, fixed_abs, tag = 'smem constant byte address 0x4 - core index']
  #allocation1 [shape = 'u32[144,128]{1,0:T(1,128)}', space=vmem, size = 0x12000, scoped, tag = 'internal scratch']
  %s0 = inlined_call_operand.hbm [shape: f32[8,256], index: 0, kind: input, shape index: {}]
  %s1 = inlined_call_operand.vmem [shape: bf16[256,128], index: 1, kind: input, shape index: {}]
  %s2 = inlined_call_operand.vmem [shape: f32[1,128], index: 2, kind: input, shape index: {}]
  %s3 = inlined_call_operand.vmem [shape: bf16[128,64], index: 3, kind: input, shape index: {}]
  %s4 = inlined_call_operand.vmem [shape: f32[1,64], index: 4, kind: input, shape index: {}]
  %s5 = inlined_call_operand.vmem [shape: bf16[64,10], index: 5, kind: input, shape index: {}]
  %s6 = inlined_call_operand.vmem [shape: f32[1,10], index: 6, kind: input, shape index: {}]
  %s7 = inlined_call_operand.hbm [shape: f32[8,10], index: 7, kind: output, shape index: {}]
  %s8 = sld [smem:[#allocation0]]
  $region42: #{tpu_custom_call.1} parent=0
    _
  %s10 = ssub.s32 1, %s8
  %s11 = scalar_select 0, %s10, %s8
  $region1: #{tpu_custom_call.1} parent=0
    #allocation2 [shape = 'u8[8192]{0}', space=vmem, size = 0x2000, scoped, tag = 'input window, operand 0, single buffered']
    #allocation3 [shape = 's32[1]{0}', space=sflag, size = 0x4, scoped, tag = 'scoped memory for tpu_custom_call.1']
    #allocation4 [shape = 's32[1]{0}', space=sflag, size = 0x4, scoped, tag = 'scoped memory for tpu_custom_call.1']
    #allocation5 [shape = 'u8[4096]{0}', space=vmem, size = 0x1000, scoped, tag = 'output window, operand 0, single buffered']
    %12 = vsyncpa [#allocation3], 0
    %13 = vsyncpa [#allocation4], 0
    // Predicated region
    $region2: #{tpu_custom_call.1} parent=1 // pred_check
      _
    $region3: #{tpu_custom_call.1} parent=1 // pred_check_branch
      %15 = sbr.rel (0) target = $region5
    $region4: #{tpu_custom_call.1} parent=1 // pred_region
      %s17 = ssub.s32 256, 256
      %18 = vsyncadd [#allocation3], %s17
      %s20 = sshll.u32 [#allocation2], 4
      %s21 = int_to_ptr.vmem [resolvable:$true] %s20
      %23 = dma.hbm_to_vmem [thread:$0]  %s0, 256, %s21, [#allocation3]
    $region5: #{tpu_custom_call.1} parent=1 // pred_fallthru
      _
    // Predicated region
    $region6: #{tpu_custom_call.1} parent=1 // pred_check
      _
    $region7: #{tpu_custom_call.1} parent=1 // pred_check_branch
      %25 = sbr.rel (0) target = $region9
    $region8: #{tpu_custom_call.1} parent=1 // pred_region
      _
    $region9: #{tpu_custom_call.1} parent=1 // pred_fallthru
      _
    // Predicated region
    $region10: #{tpu_custom_call.1} parent=1 // pred_check
      _
    $region11: #{tpu_custom_call.1} parent=1 // pred_check_branch
      %27 = sbr.rel (0) target = $region13
    $region12: #{tpu_custom_call.1} parent=1 // pred_region
      _
    $region13: #{tpu_custom_call.1} parent=1 // pred_fallthru
      _
    // Predicated region
    $region14: #{tpu_custom_call.1} parent=1 // pred_check
      _
    $region15: #{tpu_custom_call.1} parent=1 // pred_check_branch
      %29 = sbr.rel (0) target = $region17
    $region16: #{tpu_custom_call.1} parent=1 // pred_region
      _
    $region17: #{tpu_custom_call.1} parent=1 // pred_fallthru
      _
    // Predicated region
    $region18: #{tpu_custom_call.1} parent=1 // pred_check
      _
    $region19: #{tpu_custom_call.1} parent=1 // pred_check_branch
      %31 = sbr.rel (0) target = $region21
    $region20: #{tpu_custom_call.1} parent=1 // pred_region
      _
    $region21: #{tpu_custom_call.1} parent=1 // pred_fallthru
      _
    // Predicated region
    $region22: #{tpu_custom_call.1} parent=1 // pred_check
      _
    $region23: #{tpu_custom_call.1} parent=1 // pred_check_branch
      %33 = sbr.rel (0) target = $region25
    $region24: #{tpu_custom_call.1} parent=1 // pred_region
      _
    $region25: #{tpu_custom_call.1} parent=1 // pred_fallthru
      _
    // Predicated region
    $region26: #{tpu_custom_call.1} parent=1 // pred_check
      _
    $region27: #{tpu_custom_call.1} parent=1 // pred_check_branch
      %35 = sbr.rel (0) target = $region29
    $region28: #{tpu_custom_call.1} parent=1 // pred_region
      _
    $region29: #{tpu_custom_call.1} parent=1 // pred_fallthru
      _
    // Predicated region
    $region30: #{tpu_custom_call.1} parent=1 // pred_check
      _
    $region31: #{tpu_custom_call.1} parent=1 // pred_check_branch
      %37 = sbr.rel (0) target = $region33
    $region32: #{tpu_custom_call.1} parent=1 // pred_region
      %38 = dma.done [#allocation3], 256
    $region33: #{tpu_custom_call.1} parent=1 // pred_fallthru
      _
    %v40 = vld [vmem:[#allocation2] sm:$0xff]
    %v41 = vld [vmem:[#allocation2 + $0x8] sm:$0xff]
    %v42 = vpack.c.bf16 %v40, %v40
    %v43 = vpack.c.bf16 %v41, %v41
    %v44 = vld [vmem:[%s1] sm:$0xf]
    %v45 = vld [vmem:[%s1 + $0x4] sm:$0xf]
    %v46 = vld [vmem:[%s1 + $0x8] sm:$0xf]
    %v47 = vld [vmem:[%s1 + $0xc] sm:$0xf]
    %v48 = vld [vmem:[%s1 + $0x10] sm:$0xf]
    %v49 = vld [vmem:[%s1 + $0x14] sm:$0xf]
    %v50 = vld [vmem:[%s1 + $0x18] sm:$0xf]
    %v51 = vld [vmem:[%s1 + $0x1c] sm:$0xf]
    %v52 = vld [vmem:[%s1 + $0x20] sm:$0xf]
    %v53 = vld [vmem:[%s1 + $0x24] sm:$0xf]
    %v54 = vld [vmem:[%s1 + $0x28] sm:$0xf]
    %v55 = vld [vmem:[%s1 + $0x2c] sm:$0xf]
    %v56 = vld [vmem:[%s1 + $0x30] sm:$0xf]
    %v57 = vld [vmem:[%s1 + $0x34] sm:$0xf]
    %v58 = vld [vmem:[%s1 + $0x38] sm:$0xf]
    %v59 = vld [vmem:[%s1 + $0x3c] sm:$0xf]
    %v60 = vld [vmem:[%s1 + $0x40] sm:$0xf]
    %v61 = vld [vmem:[%s1 + $0x44] sm:$0xf]
    %v62 = vld [vmem:[%s1 + $0x48] sm:$0xf]
    %v63 = vld [vmem:[%s1 + $0x4c] sm:$0xf]
    %v64 = vld [vmem:[%s1 + $0x50] sm:$0xf]
    %v65 = vld [vmem:[%s1 + $0x54] sm:$0xf]
    %v66 = vld [vmem:[%s1 + $0x58] sm:$0xf]
    %v67 = vld [vmem:[%s1 + $0x5c] sm:$0xf]
    %v68 = vld [vmem:[%s1 + $0x60] sm:$0xf]
    %v69 = vld [vmem:[%s1 + $0x64] sm:$0xf]
    %v70 = vld [vmem:[%s1 + $0x68] sm:$0xf]
    %v71 = vld [vmem:[%s1 + $0x6c] sm:$0xf]
    %v72 = vld [vmem:[%s1 + $0x70] sm:$0xf]
    %v73 = vld [vmem:[%s1 + $0x74] sm:$0xf]
    %v74 = vld [vmem:[%s1 + $0x78] sm:$0xf]
    %v75 = vld [vmem:[%s1 + $0x7c] sm:$0xf]
    %v76 = vld [vmem:[%s2] sm:$0x1]
    %v78 = vlaneseq
    %v79 = vshrl.u32 %v78, 7
    %v80 = vsub.s32 0, %v79
    %v81 = vrot.slane %v76, %v80
    %v115 = vunpack.c.l.b16 %v44
    %v116 = vunpack.c.l.b16 %v45
    %v117 = vunpack.c.l.b16 %v46
    %v118 = vunpack.c.l.b16 %v47
    %v119 = vunpack.c.l.b16 %v48
    %v120 = vunpack.c.l.b16 %v49
    %v121 = vunpack.c.l.b16 %v50
    %v122 = vunpack.c.l.b16 %v51
    %v123 = vunpack.c.l.b16 %v52
    %v124 = vunpack.c.l.b16 %v53
    %v125 = vunpack.c.l.b16 %v54
    %v126 = vunpack.c.l.b16 %v55
    %v127 = vunpack.c.l.b16 %v56
    %v128 = vunpack.c.l.b16 %v57
    %v129 = vunpack.c.l.b16 %v58
    %v130 = vunpack.c.l.b16 %v59
    %v131 = vunpack.c.l.b16 %v60
    %v132 = vunpack.c.l.b16 %v61
    %v133 = vunpack.c.l.b16 %v62
    %v134 = vunpack.c.l.b16 %v63
    %v135 = vunpack.c.l.b16 %v64
    %v136 = vunpack.c.l.b16 %v65
    %v137 = vunpack.c.l.b16 %v66
    %v138 = vunpack.c.l.b16 %v67
    %v139 = vunpack.c.l.b16 %v68
    %v140 = vunpack.c.l.b16 %v69
    %v141 = vunpack.c.l.b16 %v70
    %v142 = vunpack.c.l.b16 %v71
    %v143 = vunpack.c.l.b16 %v72
    %v144 = vunpack.c.l.b16 %v73
    %v145 = vunpack.c.l.b16 %v74
    %v146 = vunpack.c.l.b16 %v75
    %v147 = vpack.c.b16 %v116, %v115
    %v148 = vpack.c.b16 %v118, %v117
    %v149 = vpack.c.b16 %v120, %v119
    %v150 = vpack.c.b16 %v122, %v121
    %v151 = vpack.c.b16 %v124, %v123
    %v152 = vpack.c.b16 %v126, %v125
    %v153 = vpack.c.b16 %v128, %v127
    %v154 = vpack.c.b16 %v130, %v129
    %v155 = vpack.c.b16 %v132, %v131
    %v156 = vpack.c.b16 %v134, %v133
    %v157 = vpack.c.b16 %v136, %v135
    %v158 = vpack.c.b16 %v138, %v137
    %v159 = vpack.c.b16 %v140, %v139
    %v160 = vpack.c.b16 %v142, %v141
    %v161 = vpack.c.b16 %v144, %v143
    %v162 = vpack.c.b16 %v146, %v145
    %179 = vmatprep.subr.bf16.mxu0 0
    %180 = vmatpush1.bf16.msra.mxu0 %v154
    %181 = vmatprep.subr.bf16.mxu0 0
    %182 = vmatpush1.bf16.msra.mxu0 %v153
    %183 = vmatprep.subr.bf16.mxu0 0
    %184 = vmatpush1.bf16.msra.mxu0 %v152
    %185 = vmatprep.subr.bf16.mxu0 0
    %186 = vmatpush1.bf16.msra.mxu0 %v151
    %187 = vmatprep.subr.bf16.mxu0 0
    %188 = vmatpush1.bf16.msra.mxu0 %v150
    %189 = vmatprep.subr.bf16.mxu0 0
    %190 = vmatpush1.bf16.msra.mxu0 %v149
    %191 = vmatprep.subr.bf16.mxu0 0
    %192 = vmatpush1.bf16.msra.mxu0 %v148
    %193 = vmatprep.subr.bf16.mxu0 0
    %194 = vmatpush1.bf16.msra.mxu0 %v147
    %195 = vmatprep.subr.bf16.mxu0 0
    %196 = vmatpush2.bf16.msra.mxu0 %v162
    %197 = vmatprep.subr.bf16.mxu0 0
    %198 = vmatpush2.bf16.msra.mxu0 %v161
    %199 = vmatprep.subr.bf16.mxu0 0
    %200 = vmatpush2.bf16.msra.mxu0 %v160
    %201 = vmatprep.subr.bf16.mxu0 0
    %202 = vmatpush2.bf16.msra.mxu0 %v159
    %203 = vmatprep.subr.bf16.mxu0 0
    %204 = vmatpush2.bf16.msra.mxu0 %v158
    %205 = vmatprep.subr.bf16.mxu0 0
    %206 = vmatpush2.bf16.msra.mxu0 %v157
    %207 = vmatprep.subr.bf16.mxu0 0
    %208 = vmatpush2.bf16.msra.mxu0 %v156
    %209 = vmatprep.subr.bf16.mxu0 0
    %210 = vmatpush2.bf16.msra.mxu0 %v155
    %211 = vmatprep.mubr.bf16.mxu0 %v43
    %212 = vmatmul.mubr.bf16.gmra.mxu0 %v42
    %v213 = vpop.f32.mrf.mxu0
    %v214 = vadd.f32 %v81, %v213
    %v215 = vpop.f32.mrf.mxu0
    %v216 = vpop.f32.mrf.mxu0
    %v217 = vpop.f32.mrf.mxu0
    %218 = vdwg.mxu0
    %v219 = vmax.f32 %v214, 0.0
    %v220 = vpack.c.bf16 %v219, %v219
    %v221 = vld [vmem:[%s3] sm:$0xf]
    %v222 = vld [vmem:[%s3 + $0x4] sm:$0xf]
    %v223 = vld [vmem:[%s3 + $0x8] sm:$0xf]
    %v224 = vld [vmem:[%s3 + $0xc] sm:$0xf]
    %v225 = vld [vmem:[%s3 + $0x10] sm:$0xf]
    %v226 = vld [vmem:[%s3 + $0x14] sm:$0xf]
    %v227 = vld [vmem:[%s3 + $0x18] sm:$0xf]
    %v228 = vld [vmem:[%s3 + $0x1c] sm:$0xf]
    %v229 = vld [vmem:[%s3 + $0x20] sm:$0xf]
    %v230 = vld [vmem:[%s3 + $0x24] sm:$0xf]
    %v231 = vld [vmem:[%s3 + $0x28] sm:$0xf]
    %v232 = vld [vmem:[%s3 + $0x2c] sm:$0xf]
    %v233 = vld [vmem:[%s3 + $0x30] sm:$0xf]
    %v234 = vld [vmem:[%s3 + $0x34] sm:$0xf]
    %v235 = vld [vmem:[%s3 + $0x38] sm:$0xf]
    %v236 = vld [vmem:[%s3 + $0x3c] sm:$0xf]
    %v237 = vld [vmem:[%s4] sm:$0x1]
    %v239 = vlaneseq
    %v240 = vshrl.u32 %v239, 7
    %v241 = vsub.s32 0, %v240
    %v242 = vrot.slane %v237, %v241
    %v260 = vunpack.c.l.b16 %v221
    %v261 = vunpack.c.l.b16 %v222
    %v262 = vunpack.c.l.b16 %v223
    %v263 = vunpack.c.l.b16 %v224
    %v264 = vunpack.c.l.b16 %v225
    %v265 = vunpack.c.l.b16 %v226
    %v266 = vunpack.c.l.b16 %v227
    %v267 = vunpack.c.l.b16 %v228
    %v268 = vunpack.c.l.b16 %v229
    %v269 = vunpack.c.l.b16 %v230
    %v270 = vunpack.c.l.b16 %v231
    %v271 = vunpack.c.l.b16 %v232
    %v272 = vunpack.c.l.b16 %v233
    %v273 = vunpack.c.l.b16 %v234
    %v274 = vunpack.c.l.b16 %v235
    %v275 = vunpack.c.l.b16 %v236
    %v276 = vpack.c.b16 %v261, %v260
    %v277 = vpack.c.b16 %v263, %v262
    %v278 = vpack.c.b16 %v265, %v264
    %v279 = vpack.c.b16 %v267, %v266
    %v280 = vpack.c.b16 %v269, %v268
    %v281 = vpack.c.b16 %v271, %v270
    %v282 = vpack.c.b16 %v273, %v272
    %v283 = vpack.c.b16 %v275, %v274
    %292 = vmatprep.subr.bf16.mxu0 0
    %293 = vmatpush1.bf16.msra.mxu0 %v283
    %294 = vmatprep.subr.bf16.mxu0 0
    %295 = vmatpush1.bf16.msra.mxu0 %v282
    %296 = vmatprep.subr.bf16.mxu0 0
    %297 = vmatpush1.bf16.msra.mxu0 %v281
    %298 = vmatprep.subr.bf16.mxu0 0
    %299 = vmatpush1.bf16.msra.mxu0 %v280
    %300 = vmatprep.subr.bf16.mxu0 0
    %301 = vmatpush1.bf16.msra.mxu0 %v279
    %302 = vmatprep.subr.bf16.mxu0 0
    %303 = vmatpush1.bf16.msra.mxu0 %v278
    %304 = vmatprep.subr.bf16.mxu0 0
    %305 = vmatpush1.bf16.msra.mxu0 %v277
    %306 = vmatprep.subr.bf16.mxu0 0
    %307 = vmatpush1.bf16.msra.mxu0 %v276
    %308 = vmatprep.subr.bf16.mxu0 0
    %309 = vmatpush2.bf16.msra.mxu0 0
    %310 = vmatprep.subr.bf16.mxu0 0
    %311 = vmatpush2.bf16.msra.mxu0 0
    %312 = vmatprep.subr.bf16.mxu0 0
    %313 = vmatpush2.bf16.msra.mxu0 0
    %314 = vmatprep.subr.bf16.mxu0 0
    %315 = vmatpush2.bf16.msra.mxu0 0
    %316 = vmatprep.subr.bf16.mxu0 0
    %317 = vmatpush2.bf16.msra.mxu0 0
    %318 = vmatprep.subr.bf16.mxu0 0
    %319 = vmatpush2.bf16.msra.mxu0 0
    %320 = vmatprep.subr.bf16.mxu0 0
    %321 = vmatpush2.bf16.msra.mxu0 0
    %322 = vmatprep.subr.bf16.mxu0 0
    %323 = vmatpush2.bf16.msra.mxu0 0
    %324 = vmatprep.mubr.bf16.mxu0 0
    %325 = vmatmul.mubr.bf16.gmra.mxu0 %v220
    %v326 = vpop.f32.mrf.mxu0
    %v327 = vadd.f32 %v242, %v326
    %v328 = vpop.f32.mrf.mxu0
    %v329 = vpop.f32.mrf.mxu0
    %v330 = vpop.f32.mrf.mxu0
    %331 = vdwg.mxu0
    %v332 = vmax.f32 %v327, 0.0
    %v333 = vpack.c.bf16 %v332, %v332
    %v334 = vld [vmem:[%s5] sm:$0xf]
    %v335 = vld [vmem:[%s5 + $0x4] sm:$0xf]
    %v336 = vld [vmem:[%s5 + $0x8] sm:$0xf]
    %v337 = vld [vmem:[%s5 + $0xc] sm:$0xf]
    %v338 = vld [vmem:[%s5 + $0x10] sm:$0xf]
    %v339 = vld [vmem:[%s5 + $0x14] sm:$0xf]
    %v340 = vld [vmem:[%s5 + $0x18] sm:$0xf]
    %v341 = vld [vmem:[%s5 + $0x1c] sm:$0xf]
    %v342 = vld [vmem:[%s6] sm:$0x1]
    %v344 = vlaneseq
    %v345 = vshrl.u32 %v344, 7
    %v346 = vsub.s32 0, %v345
    %v347 = vrot.slane %v342, %v346
    %v357 = vunpack.c.l.b16 %v334
    %v358 = vunpack.c.l.b16 %v335
    %v359 = vunpack.c.l.b16 %v336
    %v360 = vunpack.c.l.b16 %v337
    %v361 = vunpack.c.l.b16 %v338
    %v362 = vunpack.c.l.b16 %v339
    %v363 = vunpack.c.l.b16 %v340
    %v364 = vunpack.c.l.b16 %v341
    %v365 = vpack.c.b16 %v358, %v357
    %v366 = vpack.c.b16 %v360, %v359
    %v367 = vpack.c.b16 %v362, %v361
    %v368 = vpack.c.b16 %v364, %v363
    %vm373 = vcmask 523264
    %v375 = vsel %vm373, %v333, 0
    %377 = vmatprep.subr.bf16.mxu0 0
    %378 = vmatpush1.bf16.msra.mxu0 0
    %379 = vmatprep.subr.bf16.mxu0 0
    %380 = vmatpush1.bf16.msra.mxu0 0
    %381 = vmatprep.subr.bf16.mxu0 0
    %382 = vmatpush1.bf16.msra.mxu0 0
    %383 = vmatprep.subr.bf16.mxu0 0
    %384 = vmatpush1.bf16.msra.mxu0 0
    %385 = vmatprep.subr.bf16.mxu0 0
    %386 = vmatpush1.bf16.msra.mxu0 %v368
    %387 = vmatprep.subr.bf16.mxu0 0
    %388 = vmatpush1.bf16.msra.mxu0 %v367
    %389 = vmatprep.subr.bf16.mxu0 0
    %390 = vmatpush1.bf16.msra.mxu0 %v366
    %391 = vmatprep.subr.bf16.mxu0 0
    %392 = vmatpush1.bf16.msra.mxu0 %v365
    %393 = vmatprep.subr.bf16.mxu0 0
    %394 = vmatpush2.bf16.msra.mxu0 0
    %395 = vmatprep.subr.bf16.mxu0 0
    %396 = vmatpush2.bf16.msra.mxu0 0
    %397 = vmatprep.subr.bf16.mxu0 0
    %398 = vmatpush2.bf16.msra.mxu0 0
    %399 = vmatprep.subr.bf16.mxu0 0
    %400 = vmatpush2.bf16.msra.mxu0 0
    %401 = vmatprep.subr.bf16.mxu0 0
    %402 = vmatpush2.bf16.msra.mxu0 0
    %403 = vmatprep.subr.bf16.mxu0 0
    %404 = vmatpush2.bf16.msra.mxu0 0
    %405 = vmatprep.subr.bf16.mxu0 0
    %406 = vmatpush2.bf16.msra.mxu0 0
    %407 = vmatprep.subr.bf16.mxu0 0
    %408 = vmatpush2.bf16.msra.mxu0 0
    %409 = vmatprep.mubr.bf16.mxu0 0
    %410 = vmatmul.mubr.bf16.gmra.mxu0 %v375
    %v411 = vpop.f32.mrf.mxu0
    %v412 = vadd.f32 %v347, %v411
    %v413 = vpop.f32.mrf.mxu0
    %v414 = vpop.f32.mrf.mxu0
    %v415 = vpop.f32.mrf.mxu0
    %416 = vdwg.mxu0
    %vm417 = vcmask 80896
    %418 = vst.msk [vmem:[#allocation5] sm:$0xff] %vm417, %v412
    // Predicated region
    $region34: #{tpu_custom_call.1} parent=1 // pred_check
      _
    $region35: #{tpu_custom_call.1} parent=1 // pred_check_branch
      %420 = sbr.rel (0) target = $region37
    $region36: #{tpu_custom_call.1} parent=1 // pred_region
      %s422 = ssub.s32 128, 128
      %423 = vsyncadd [#allocation4], %s422
      %s425 = sshll.u32 [#allocation5], 4
      %s426 = int_to_ptr.vmem [resolvable:$true] %s425
      %428 = dma.vmem_to_hbm [thread:$0]  %s426, 128, %s7, [#allocation4]
    $region37: #{tpu_custom_call.1} parent=1 // pred_fallthru
      _
    // Predicated region
    $region38: #{tpu_custom_call.1} parent=1 // pred_check
      _
    $region39: #{tpu_custom_call.1} parent=1 // pred_check_branch
      %430 = sbr.rel (0) target = $region41
    $region40: #{tpu_custom_call.1} parent=1 // pred_region
      %431 = dma.done [#allocation4], 128
    $region41: #{tpu_custom_call.1} parent=1 // pred_fallthru
      _
    %432 = vsyncpa [#allocation3], 1
    %433 = vsyncpa [#allocation4], 1

</llo_original>
